<compile_context>
chip_gen: v7x
topology: tpu7x:2x2x1
jax: 0.10.0
libtpu: 0.0.40
codegen_flags: <defaults>
</compile_context>

<pallas_src>
import math
import numpy as np
import jax
import jax.numpy as jnp
from jax.experimental import pallas as pl
from jax.experimental.pallas import tpu as pltpu


# ------------------------------ irreps helpers ------------------------------------------
def _norm_factor(l, irrep_normalization):
    d = 2 * l + 1
    if irrep_normalization == "norm":
        return float(np.sqrt(d))
    if irrep_normalization == "component":
        return float(1.0 / np.sqrt(d))
    raise ValueError(f"unknown irrep_normalization: {irrep_normalization}")


def _irreps_dims(irreps):
    D = sum(mul * (2 * l + 1) for mul, l in irreps)
    G = sum(mul for mul, _ in irreps)
    return D, G


def _build_projection(irreps, irrep_normalization, multiplier, pack):
    """(pack*D, pack*G) block-diagonal matrix mapping squared channels to per-group sums.
    The ['0e'] tensor-product normalization AND multiplier**2 are folded in, so the kernel
    only computes sqrt(x2 @ proj)."""
    D, G = _irreps_dims(irreps)
    base = np.zeros((D, G), np.float32)
    m2 = float(multiplier) * float(multiplier)
    ch = g = 0
    for mul, l in irreps:
        d = 2 * l + 1
        c = m2 * _norm_factor(l, irrep_normalization)
        for _ in range(mul):
            base[ch:ch + d, g] = c
            ch += d
            g += 1
    if pack > 1:
        base = np.kron(np.eye(pack, dtype=np.float32), base)
    return jnp.asarray(base)


def _choose_pack(D, G, rows, max_lanes=4096):
    """Smallest k with (k*D) % 128 == 0 (preferring (k*G) % 128 == 0 too) dividing `rows`."""
    if rows <= 0:
        return 1
    kD = 128 // math.gcd(D, 128)           # smallest k making the input lane-dense
    kG = 128 // math.gcd(G, 128)           # smallest k making the output lane-dense
    k_both = kD * kG // math.gcd(kD, kG)
    for k in (k_both, kD):
        if k > 1 and rows % k == 0 and k * D <= max_lanes:
            return k
    return 1


def _choose_tile_rows(n_rows, period, dp, gp, target_bytes=4 << 20, vmem_budget=14 << 20):
    """Rows per grid step: multiple of `period` (query broadcast period) and of 8 (sublane),
    sized so per-step streamed bytes amortize the ~0.35us pipeline overhead while the
    double-buffered footprint stays inside the smallest (v5e) scoped-VMEM default."""
    vmem_budget = max(vmem_budget - 2 * dp * gp * 4, 1 << 20)   # room for the resident proj
    in_row = dp * 4
    out_row = gp * 4
    per_row = 4 * in_row + 2 * out_row        # 2x desc bufs + 2x qf bufs + 2x out bufs
    budget_rows = max(vmem_budget // per_row, 1)
    target_rows = max(target_bytes // in_row, 1)
    tile = int(min(budget_rows, target_rows, n_rows))
    align = period * (8 // math.gcd(period, 8))                  # lcm(period, 8)
    if tile >= n_rows:
        tile = n_rows
        # a big single-step grid would leave one v7x TensorCore idle under ("parallel",)
        if n_rows > 4096 and n_rows >= 2 * align:
            half = -(-((n_rows + 1) // 2) // align) * align
            tile = min(half, n_rows)
    else:
        tile = max(align, (tile // align) * align)
        tile = min(tile, n_rows)
    if tile % period != 0:          # safety net: n_rows is always a multiple of period
        tile = n_rows
    return int(tile)


# --------------------------------- Pallas kernel -----------------------------------------
def irrepwise_l1_kernel(desc_ref, qf_ref, proj_ref, out_ref):
    diff = desc_ref[...] - qf_ref[...]                              # (TILE, Dp)   VPU
    gsq = jnp.dot(diff * diff, proj_ref[...],                       # (TILE, Gp)   MXU reduce
                  preferred_element_type=jnp.float32,
                  precision=jax.lax.Precision.HIGHEST)
    out_ref[...] = jnp.sqrt(jnp.maximum(gsq, 0.0))                  # multiplier already folded in


# --------------------------------- wrapper ------------------------------------------------
def irrepwise_l1_error(descriptor, query_feature, irreps,
                       irrep_normalization="norm", multiplier=6.0,
                       target_tile_bytes=4 << 20):
    descriptor = jnp.asarray(descriptor, jnp.float32)
    query_feature = jnp.asarray(query_feature, jnp.float32)
    D, G = _irreps_dims(irreps)
    assert descriptor.shape[-1] == D, (descriptor.shape, D)
    assert query_feature.shape[-1] == D, (query_feature.shape, D)

    full_shape = tuple(jnp.broadcast_shapes(descriptor.shape, query_feature.shape))
    lead = full_shape[:-1]
    N = int(np.prod(lead, dtype=np.int64)) if lead else 1

    # strip leading singleton dims of the query
    q_shape = query_feature.shape
    while len(q_shape) > 1 and q_shape[0] == 1:
        q_shape = q_shape[1:]
    qf_core = query_feature.reshape(q_shape)
    nq = int(np.prod(q_shape[:-1], dtype=np.int64)) if len(q_shape) > 1 else 1

    # Fast path: descriptor already has the broadcast shape and the query only broadcasts
    # over leading dims -> keep the (small) query VMEM-resident; no N x D broadcast in HBM.
    fast = (tuple(descriptor.shape) == full_shape
            and full_shape[len(full_shape) - len(q_shape):] == tuple(q_shape)
            and nq > 0 and N % nq == 0
            and nq * D * 4 <= (4 << 20))

    if fast:
        pack = _choose_pack(D, G, nq)
        rows = N // pack
        nqp = nq // pack                         # query broadcast period, in packed rows
        desc2 = descriptor.reshape(rows, pack * D)      # zero-copy (contiguous row-major)
        qf2 = qf_core.reshape(nqp, pack * D)
        period = nqp
    else:
        # TODO(synk): generic/middle-dim broadcasting falls back to materializing the
        # broadcast (one extra HBM pass); both operands are then streamed identically.
        desc_full = jnp.broadcast_to(descriptor, full_shape)
        qf_full = jnp.broadcast_to(query_feature, full_shape)
        pack = _choose_pack(D, G, N)
        rows = N // pack
        desc2 = desc_full.reshape(rows, pack * D)
        qf2 = qf_full.reshape(rows, pack * D)
        period = 1

    Dp, Gp = pack * D, pack * G
    proj = _build_projection(irreps, irrep_normalization, multiplier, pack)

    tile = _choose_tile_rows(rows, period, Dp, Gp, target_bytes=target_tile_bytes)
    grid = (pl.cdiv(rows, tile),)    # ragged last block: OOB reads are garbage but only
                                     # feed dropped stores (rows are fully independent)

    if fast:
        reps = tile // period
        qf_arg = jnp.tile(qf2, (reps, 1)) if reps > 1 else qf2      # exactly one row-tile
        qf_spec = pl.BlockSpec((tile, Dp), lambda i: (0, 0))        # resident: DMA'd once
    else:
        qf_arg = qf2
        qf_spec = pl.BlockSpec((tile, Dp), lambda i: (i, 0))        # streamed like descriptor

    out = pl.pallas_call(
        irrepwise_l1_kernel,
        out_shape=jax.ShapeDtypeStruct((rows, Gp), jnp.float32),
        grid_spec=pltpu.PrefetchScalarGridSpec(
            num_scalar_prefetch=0,
            grid=grid,
            in_specs=[
                pl.BlockSpec((tile, Dp), lambda i: (i, 0)),         # streamed descriptor tile
                qf_spec,
                pl.BlockSpec((Dp, Gp), lambda i: (0, 0)),           # resident projection
            ],
            out_specs=pl.BlockSpec((tile, Gp), lambda i: (i, 0)),
        ),
        compiler_params=pltpu.CompilerParams(dimension_semantics=("parallel",)),
    )(desc2, qf_arg, proj)

    if pack > 1:
        out = out.reshape(rows, pack, G).reshape(N, G)              # unpack lane-packed groups
    return out.reshape(lead + (G,))


# ------------------------- pure-JAX reference (mirrors PyTorch) ---------------------------
def reference_forward(descriptor, query_feature, irreps,
                      irrep_normalization="norm", multiplier=6.0):
    diff = descriptor - query_feature
    outs = []
    ch = 0
    for mul, l in irreps:
        d = 2 * l + 1
        c = _norm_factor(l, irrep_normalization)
        blk = diff[..., ch:ch + mul * d].reshape(diff.shape[:-1] + (mul, d))
        outs.append(jnp.sqrt(c * jnp.sum(blk * blk, axis=-1)))
        ch += mul * d
    return multiplier * jnp.concatenate(outs, axis=-1)


# ------------------------------------------------------------------------------------------
if __name__ == "__main__":
    # irreps "8x0e + 8x1e": 8 scalar groups + 8 vector groups, D = 8 + 24 = 32, G = 16
    irreps = [(8, 0), (8, 1)]
    D = sum(m * (2 * l + 1) for m, l in irreps)

    key = jax.random.PRNGKey(0)
    k1, k2, k3, k4, k5, k6 = jax.random.split(key, 6)

    def check(desc, qf, **kw):
        got = irrepwise_l1_error(desc, qf, irreps, irrep_normalization="norm",
                                 multiplier=6.0, **kw)
        jax.block_until_ready(got)
        want = reference_forward(desc, qf, irreps, irrep_normalization="norm",
                                 multiplier=6.0)
        if not np.allclose(np.asarray(got), np.asarray(want), rtol=1e-3, atol=1e-3):
            raise AssertionError(f"mismatch:\n{got}\nvs\n{want}")

    # 1) fast path: query broadcasts over the leading (target) dim, lane-packed (k=8)
    desc = jax.random.normal(k1, (4, 8, D), dtype=jnp.float32)
    qf = jax.random.normal(k2, (8, D), dtype=jnp.float32)
    check(desc, qf)

    # 2) fallback path: query broadcasts over a middle dim -> materialized + streamed
    desc = jax.random.normal(k3, (4, 7, D), dtype=jnp.float32)
    qf = jax.random.normal(k4, (4, 1, D), dtype=jnp.float32)
    check(desc, qf)

    # 3) fast path with a multi-step ragged grid (tiny tile budget forces several blocks)
    desc = jax.random.normal(k5, (37, 8, D), dtype=jnp.float32)
    qf = jax.random.normal(k6, (8, D), dtype=jnp.float32)
    check(desc, qf, target_tile_bytes=8192)

    print("KERNEL_OK")
</pallas_src>

<mosaic_0001>
module attributes {stable_mosaic.version = 11 : i64} {
  func.func @irrepwise_l1_kernel(%arg0: i32, %arg1: memref<4x256xf32, #tpu.memory_space<vmem>>, %arg2: memref<4x256xf32, #tpu.memory_space<vmem>>, %arg3: memref<256x128xf32, #tpu.memory_space<vmem>>, %arg4: memref<4x128xf32, #tpu.memory_space<vmem>>) attributes {dimension_semantics = [#tpu.dimension_semantics<parallel>], iteration_bounds = array<i64: 1>, scalar_prefetch = 0 : i64, scratch_operands = 0 : i64, tpu.core_type = #tpu.core_type<tc>, window_params = [{transform_indices = @transform_0, window_bounds = array<i64: 4, 256>}, {pipeline_mode = #tpu.pipeline_mode<synchronous>, transform_indices = @transform_1, window_bounds = array<i64: 4, 256>}, {pipeline_mode = #tpu.pipeline_mode<synchronous>, transform_indices = @transform_2, window_bounds = array<i64: 256, 128>}, {transform_indices = @transform_3, window_bounds = array<i64: 4, 128>}]} {
    %c0 = arith.constant 0 : index
    %c0_0 = arith.constant 0 : index
    %0 = vector.load %arg1[%c0, %c0_0] : memref<4x256xf32, #tpu.memory_space<vmem>>, vector<4x256xf32>
    %c0_1 = arith.constant 0 : index
    %c0_2 = arith.constant 0 : index
    %1 = vector.load %arg2[%c0_1, %c0_2] : memref<4x256xf32, #tpu.memory_space<vmem>>, vector<4x256xf32>
    %2 = arith.subf %0, %1 : vector<4x256xf32>
    %3 = arith.mulf %2, %2 : vector<4x256xf32>
    %c0_3 = arith.constant 0 : index
    %c0_4 = arith.constant 0 : index
    %4 = vector.load %arg3[%c0_3, %c0_4] : memref<256x128xf32, #tpu.memory_space<vmem>>, vector<256x128xf32>
    %cst = arith.constant dense<0.000000e+00> : vector<4x128xf32>
    %5 = tpu.matmul %3, %4, %cst {dimension_numbers = #tpu.dot_dimension_numbers<[1], [0], [0], [1], [0, 0, 1, 1], [], []>, precision = #tpu.contract_precision<fp32>} : vector<4x256xf32>, vector<256x128xf32>, vector<4x128xf32> -> vector<4x128xf32>
    %cst_5 = arith.constant 0.000000e+00 : f32
    %6 = vector.broadcast %cst_5 : f32 to vector<4x128xf32>
    %7 = arith.maximumf %5, %6 : vector<4x128xf32>
    %8 = math.sqrt %7 : vector<4x128xf32>
    %c0_6 = arith.constant 0 : index
    %c0_7 = arith.constant 0 : index
    %9 = vector.load %arg4[%c0_6, %c0_7] : memref<4x128xf32, #tpu.memory_space<vmem>>, vector<4x128xf32>
    tpu.vector_store %arg4[%c0_6, %c0_7], %8 {strides = array<i32>} : memref<4x128xf32, #tpu.memory_space<vmem>>, vector<4x128xf32>,
    return
  }
  func.func @transform_0(%arg0: i32) -> (i32, i32) {
    %c0_i32 = arith.constant 0 : i32
    %c0_i32_0 = arith.constant 0 : i32
    return %arg0, %c0_i32 : i32, i32
  }
  func.func @transform_1(%arg0: i32) -> (i32, i32) {
    %c0_i32 = arith.constant 0 : i32
    %c0_i32_0 = arith.constant 0 : i32
    %c0_i32_1 = arith.constant 0 : i32
    return %c0_i32, %c0_i32_0 : i32, i32
  }
  func.func @transform_2(%arg0: i32) -> (i32, i32) {
    %c0_i32 = arith.constant 0 : i32
    %c0_i32_0 = arith.constant 0 : i32
    %c0_i32_1 = arith.constant 0 : i32
    return %c0_i32, %c0_i32_0 : i32, i32
  }
  func.func @transform_3(%arg0: i32) -> (i32, i32) {
    %c0_i32 = arith.constant 0 : i32
    %c0_i32_0 = arith.constant 0 : i32
    return %arg0, %c0_i32 : i32, i32
  }
}

</mosaic_0001>

<llo_original>
// kernel: tpu_custom_call.1
$region0: #{tpu_custom_call.1}
  #allocation0 [shape = 'u32[]', space=smem, size = 0x4, offset = 0x4, fixed_abs, tag = 'smem constant byte address 0x4 - core index']
  #allocation1 [shape = 'u32[144,128]{1,0:T(1,128)}', space=vmem, size = 0x12000, scoped, tag = 'internal scratch']
  %s0 = inlined_call_operand.hbm [shape: f32[4,256], index: 0, kind: input, shape index: {}]
  %s1 = inlined_call_operand.hbm [shape: f32[4,256], index: 1, kind: input, shape index: {}]
  %s2 = inlined_call_operand.hbm [shape: f32[256,128], index: 2, kind: input, shape index: {}]
  %s3 = inlined_call_operand.hbm [shape: f32[4,128], index: 3, kind: output, shape index: {}]
  %s4 = sld [smem:[#allocation0]]
  $region34: #{tpu_custom_call.1} parent=0
    _
  %s6 = ssub.s32 1, %s4
  %s7 = scalar_select 0, %s6, %s4
  $region1: #{tpu_custom_call.1} parent=0
    #allocation2 [shape = 'u8[4096]{0}', space=vmem, size = 0x1000, scoped, tag = 'input window, operand 0, single buffered']
    #allocation3 [shape = 's32[1]{0}', space=sflag, size = 0x4, scoped, tag = 'scoped memory for tpu_custom_call.1']
    #allocation4 [shape = 's32[1]{0}', space=sflag, size = 0x4, scoped, tag = 'scoped memory for tpu_custom_call.1']
    #allocation5 [shape = 'u8[4096]{0}', space=vmem, size = 0x1000, scoped, tag = 'input window, operand 1, single buffered']
    #allocation6 [shape = 's32[1]{0}', space=sflag, size = 0x4, scoped, tag = 'scoped memory for tpu_custom_call.1']
    #allocation7 [shape = 'u8[131072]{0}', space=vmem, size = 0x20000, scoped, tag = 'input window, operand 2, single buffered']
    #allocation8 [shape = 'u8[2048]{0}', space=vmem, size = 0x800, scoped, tag = 'output window, operand 0, single buffered']
    %8 = vsyncpa [#allocation3], 0
    %9 = vsyncpa [#allocation6], 0
    %10 = vsyncpa [#allocation4], 0
    // Predicated region
    $region2: #{tpu_custom_call.1} parent=1 // pred_check
      _
    $region3: #{tpu_custom_call.1} parent=1 // pred_check_branch
      %12 = sbr.rel (0) target = $region5
    $region4: #{tpu_custom_call.1} parent=1 // pred_region
      %s14 = ssub.s32 128, 128
      %15 = vsyncadd [#allocation3], %s14
      %s17 = sshll.u32 [#allocation2], 4
      %s18 = int_to_ptr.vmem [resolvable:$true] %s17
      %20 = dma.hbm_to_vmem [thread:$0]  %s0, 128, %s18, [#allocation3]
    $region5: #{tpu_custom_call.1} parent=1 // pred_fallthru
      _
    // Predicated region
    $region6: #{tpu_custom_call.1} parent=1 // pred_check
      _
    $region7: #{tpu_custom_call.1} parent=1 // pred_check_branch
      %22 = sbr.rel (0) target = $region9
    $region8: #{tpu_custom_call.1} parent=1 // pred_region
      %s24 = ssub.s32 128, 128
      %25 = vsyncadd [#allocation6], %s24
      %s27 = sshll.u32 [#allocation5], 4
      %s28 = int_to_ptr.vmem [resolvable:$true] %s27
      %30 = dma.hbm_to_vmem [thread:$0]  %s1, 128, %s28, [#allocation6]
    $region9: #{tpu_custom_call.1} parent=1 // pred_fallthru
      _
    // Predicated region
    $region10: #{tpu_custom_call.1} parent=1 // pred_check
      _
    $region11: #{tpu_custom_call.1} parent=1 // pred_check_branch
      %32 = sbr.rel (0) target = $region13
    $region12: #{tpu_custom_call.1} parent=1 // pred_region
      %s34 = ssub.s32 4096, 4096
      %35 = vsyncadd [#allocation6], %s34
      %s36 = sshll.u32 [#allocation7], 4
      %s37 = int_to_ptr.vmem [resolvable:$true] %s36
      %42 = dma.hbm_to_vmem [thread:$0]  %s2, 4096, %s37, [#allocation6], 128, 128, 8
    $region13: #{tpu_custom_call.1} parent=1 // pred_fallthru
      _
    // Predicated region
    $region14: #{tpu_custom_call.1} parent=1 // pred_check
      _
    $region15: #{tpu_custom_call.1} parent=1 // pred_check_branch
      %44 = sbr.rel (0) target = $region17
    $region16: #{tpu_custom_call.1} parent=1 // pred_region
      %45 = dma.done [#allocation3], 128
    $region17: #{tpu_custom_call.1} parent=1 // pred_fallthru
      _
    // Predicated region
    $region18: #{tpu_custom_call.1} parent=1 // pred_check
      _
    $region19: #{tpu_custom_call.1} parent=1 // pred_check_branch
      %47 = sbr.rel (0) target = $region21
    $region20: #{tpu_custom_call.1} parent=1 // pred_region
      %48 = dma.done [#allocation6], 128
    $region21: #{tpu_custom_call.1} parent=1 // pred_fallthru
      _
    // Predicated region
    $region22: #{tpu_custom_call.1} parent=1 // pred_check
      _
    $region23: #{tpu_custom_call.1} parent=1 // pred_check_branch
      %50 = sbr.rel (0) target = $region25
    $region24: #{tpu_custom_call.1} parent=1 // pred_region
      %51 = dma.done [#allocation6], 4096
    $region25: #{tpu_custom_call.1} parent=1 // pred_fallthru
      _
    %v52 = vld [vmem:[#allocation2] sm:$0xff]
    %v53 = vld [vmem:[#allocation5] sm:$0xff]
    %v54 = vsub.f32 %v52, %v53
    %v55 = vmul.f32 %v54, %v54
    %v56 = vld [vmem:[#allocation7] sm:$0xff]
    %v57 = vld [vmem:[#allocation7 + $0x8] sm:$0xff]
    %v58 = vld [vmem:[#allocation7 + $0x10] sm:$0xff]
    %v59 = vld [vmem:[#allocation7 + $0x18] sm:$0xff]
    %v60 = vld [vmem:[#allocation7 + $0x20] sm:$0xff]
    %v61 = vld [vmem:[#allocation7 + $0x28] sm:$0xff]
    %v62 = vld [vmem:[#allocation7 + $0x30] sm:$0xff]
    %v63 = vld [vmem:[#allocation7 + $0x38] sm:$0xff]
    %v64 = vld [vmem:[#allocation7 + $0x40] sm:$0xff]
    %v65 = vld [vmem:[#allocation7 + $0x48] sm:$0xff]
    %v66 = vld [vmem:[#allocation7 + $0x50] sm:$0xff]
    %v67 = vld [vmem:[#allocation7 + $0x58] sm:$0xff]
    %v68 = vld [vmem:[#allocation7 + $0x60] sm:$0xff]
    %v69 = vld [vmem:[#allocation7 + $0x68] sm:$0xff]
    %v70 = vld [vmem:[#allocation7 + $0x70] sm:$0xff]
    %v71 = vld [vmem:[#allocation7 + $0x78] sm:$0xff]
    %v72 = vld [vmem:[#allocation7 + $0x80] sm:$0xff]
    %v73 = vld [vmem:[#allocation7 + $0x88] sm:$0xff]
    %v74 = vld [vmem:[#allocation7 + $0x90] sm:$0xff]
    %v75 = vld [vmem:[#allocation7 + $0x98] sm:$0xff]
    %v76 = vld [vmem:[#allocation7 + $0xa0] sm:$0xff]
    %v77 = vld [vmem:[#allocation7 + $0xa8] sm:$0xff]
    %v78 = vld [vmem:[#allocation7 + $0xb0] sm:$0xff]
    %v79 = vld [vmem:[#allocation7 + $0xb8] sm:$0xff]
    %v80 = vld [vmem:[#allocation7 + $0xc0] sm:$0xff]
    %v81 = vld [vmem:[#allocation7 + $0xc8] sm:$0xff]
    %v82 = vld [vmem:[#allocation7 + $0xd0] sm:$0xff]
    %v83 = vld [vmem:[#allocation7 + $0xd8] sm:$0xff]
    %v84 = vld [vmem:[#allocation7 + $0xe0] sm:$0xff]
    %v85 = vld [vmem:[#allocation7 + $0xe8] sm:$0xff]
    %v86 = vld [vmem:[#allocation7 + $0xf0] sm:$0xff]
    %v87 = vld [vmem:[#allocation7 + $0xf8] sm:$0xff]
    %v89 = vcombine.high %v55, %v55
    %91 = vmatprep.subr.mxu0 0.0
    %v92 = vand.u32 %v56, 4294901760
    %93 = vmatpush1.msra.mxu0 %v92
    %94 = vmatprep.subr.mxu0 0.0
    %v95 = vand.u32 %v57, 4294901760
    %96 = vmatpush1.msra.mxu0 %v95
    %97 = vmatprep.subr.mxu0 0.0
    %v98 = vand.u32 %v58, 4294901760
    %99 = vmatpush1.msra.mxu0 %v98
    %100 = vmatprep.subr.mxu0 0.0
    %v101 = vand.u32 %v59, 4294901760
    %102 = vmatpush1.msra.mxu0 %v101
    %103 = vmatprep.subr.mxu0 0.0
    %v104 = vand.u32 %v60, 4294901760
    %105 = vmatpush1.msra.mxu0 %v104
    %106 = vmatprep.subr.mxu0 0.0
    %v107 = vand.u32 %v61, 4294901760
    %108 = vmatpush1.msra.mxu0 %v107
    %109 = vmatprep.subr.mxu0 0.0
    %v110 = vand.u32 %v62, 4294901760
    %111 = vmatpush1.msra.mxu0 %v110
    %112 = vmatprep.subr.mxu0 0.0
    %v113 = vand.u32 %v63, 4294901760
    %114 = vmatpush1.msra.mxu0 %v113
    %115 = vmatprep.subr.mxu0 0.0
    %v116 = vand.u32 %v64, 4294901760
    %117 = vmatpush1.msra.mxu0 %v116
    %118 = vmatprep.subr.mxu0 0.0
    %v119 = vand.u32 %v65, 4294901760
    %120 = vmatpush1.msra.mxu0 %v119
    %121 = vmatprep.subr.mxu0 0.0
    %v122 = vand.u32 %v66, 4294901760
    %123 = vmatpush1.msra.mxu0 %v122
    %124 = vmatprep.subr.mxu0 0.0
    %v125 = vand.u32 %v67, 4294901760
    %126 = vmatpush1.msra.mxu0 %v125
    %127 = vmatprep.subr.mxu0 0.0
    %v128 = vand.u32 %v68, 4294901760
    %129 = vmatpush1.msra.mxu0 %v128
    %130 = vmatprep.subr.mxu0 0.0
    %v131 = vand.u32 %v69, 4294901760
    %132 = vmatpush1.msra.mxu0 %v131
    %133 = vmatprep.subr.mxu0 0.0
    %v134 = vand.u32 %v70, 4294901760
    %135 = vmatpush1.msra.mxu0 %v134
    %136 = vmatprep.subr.mxu0 0.0
    %v137 = vand.u32 %v71, 4294901760
    %138 = vmatpush1.msra.mxu0 %v137
    %139 = vmatprep.subr.mxu0 0.0
    %v140 = vand.u32 %v72, 4294901760
    %141 = vmatpush1.msra.mxu0 %v140
    %142 = vmatprep.subr.mxu0 0.0
    %v143 = vand.u32 %v73, 4294901760
    %144 = vmatpush1.msra.mxu0 %v143
    %145 = vmatprep.subr.mxu0 0.0
    %v146 = vand.u32 %v74, 4294901760
    %147 = vmatpush1.msra.mxu0 %v146
    %148 = vmatprep.subr.mxu0 0.0
    %v149 = vand.u32 %v75, 4294901760
    %150 = vmatpush1.msra.mxu0 %v149
    %151 = vmatprep.subr.mxu0 0.0
    %v152 = vand.u32 %v76, 4294901760
    %153 = vmatpush1.msra.mxu0 %v152
    %154 = vmatprep.subr.mxu0 0.0
    %v155 = vand.u32 %v77, 4294901760
    %156 = vmatpush1.msra.mxu0 %v155
    %157 = vmatprep.subr.mxu0 0.0
    %v158 = vand.u32 %v78, 4294901760
    %159 = vmatpush1.msra.mxu0 %v158
    %160 = vmatprep.subr.mxu0 0.0
    %v161 = vand.u32 %v79, 4294901760
    %162 = vmatpush1.msra.mxu0 %v161
    %163 = vmatprep.subr.mxu0 0.0
    %v164 = vand.u32 %v80, 4294901760
    %165 = vmatpush1.msra.mxu0 %v164
    %166 = vmatprep.subr.mxu0 0.0
    %v167 = vand.u32 %v81, 4294901760
    %168 = vmatpush1.msra.mxu0 %v167
    %169 = vmatprep.subr.mxu0 0.0
    %v170 = vand.u32 %v82, 4294901760
    %171 = vmatpush1.msra.mxu0 %v170
    %172 = vmatprep.subr.mxu0 0.0
    %v173 = vand.u32 %v83, 4294901760
    %174 = vmatpush1.msra.mxu0 %v173
    %175 = vmatprep.subr.mxu0 0.0
    %v176 = vand.u32 %v84, 4294901760
    %177 = vmatpush1.msra.mxu0 %v176
    %178 = vmatprep.subr.mxu0 0.0
    %v179 = vand.u32 %v85, 4294901760
    %180 = vmatpush1.msra.mxu0 %v179
    %181 = vmatprep.subr.mxu0 0.0
    %v182 = vand.u32 %v86, 4294901760
    %183 = vmatpush1.msra.mxu0 %v182
    %184 = vmatprep.subr.mxu0 0.0
    %v185 = vand.u32 %v87, 4294901760
    %186 = vmatpush1.msra.mxu0 %v185
    %v187 = vand.u32 %v89, 4294901760
    %v188 = vsub.f32 %v89, %v187
    %v189 = vand.u32 %v188, 4294901760
    %v190 = vsub.f32 %v188, %v189
    %v191 = vand.u32 %v190, 4294901760
    %192 = vmatprep.mubr.f32.mxu0 %v191
    %v193 = vand.u32 %v55, 4294901760
    %v194 = vsub.f32 %v55, %v193
    %v195 = vand.u32 %v194, 4294901760
    %v196 = vsub.f32 %v194, %v195
    %v197 = vand.u32 %v196, 4294901760
    %198 = vmatmul.mubr.f32.gmra.mrb[0].mxu0 %v197
    %v199 = vpop.f32.mrb[0].mxu0
    %v200 = vadd.f32 0.0, %v199
    %v201 = vpop.f32.mrb[0].mxu0
    %202 = vdwg.mxu0
    %203 = vmatprep.subr.mxu0 0.0
    %v204 = vand.u32 %v56, 4294901760
    %v205 = vsub.f32 %v56, %v204
    %v206 = vand.u32 %v205, 4294901760
    %v207 = vsub.f32 %v205, %v206
    %v208 = vand.u32 %v207, 4294901760
    %209 = vmatpush1.msra.mxu0 %v208
    %210 = vmatprep.subr.mxu0 0.0
    %v211 = vand.u32 %v57, 4294901760
    %v212 = vsub.f32 %v57, %v211
    %v213 = vand.u32 %v212, 4294901760
    %v214 = vsub.f32 %v212, %v213
    %v215 = vand.u32 %v214, 4294901760
    %216 = vmatpush1.msra.mxu0 %v215
    %217 = vmatprep.subr.mxu0 0.0
    %v218 = vand.u32 %v58, 4294901760
    %v219 = vsub.f32 %v58, %v218
    %v220 = vand.u32 %v219, 4294901760
    %v221 = vsub.f32 %v219, %v220
    %v222 = vand.u32 %v221, 4294901760
    %223 = vmatpush1.msra.mxu0 %v222
    %224 = vmatprep.subr.mxu0 0.0
    %v225 = vand.u32 %v59, 4294901760
    %v226 = vsub.f32 %v59, %v225
    %v227 = vand.u32 %v226, 4294901760
    %v228 = vsub.f32 %v226, %v227
    %v229 = vand.u32 %v228, 4294901760
    %230 = vmatpush1.msra.mxu0 %v229
    %231 = vmatprep.subr.mxu0 0.0
    %v232 = vand.u32 %v60, 4294901760
    %v233 = vsub.f32 %v60, %v232
    %v234 = vand.u32 %v233, 4294901760
    %v235 = vsub.f32 %v233, %v234
    %v236 = vand.u32 %v235, 4294901760
    %237 = vmatpush1.msra.mxu0 %v236
    %238 = vmatprep.subr.mxu0 0.0
    %v239 = vand.u32 %v61, 4294901760
    %v240 = vsub.f32 %v61, %v239
    %v241 = vand.u32 %v240, 4294901760
    %v242 = vsub.f32 %v240, %v241
    %v243 = vand.u32 %v242, 4294901760
    %244 = vmatpush1.msra.mxu0 %v243
    %245 = vmatprep.subr.mxu0 0.0
    %v246 = vand.u32 %v62, 4294901760
    %v247 = vsub.f32 %v62, %v246
    %v248 = vand.u32 %v247, 4294901760
    %v249 = vsub.f32 %v247, %v248
    %v250 = vand.u32 %v249, 4294901760
    %251 = vmatpush1.msra.mxu0 %v250
    %252 = vmatprep.subr.mxu0 0.0
    %v253 = vand.u32 %v63, 4294901760
    %v254 = vsub.f32 %v63, %v253
    %v255 = vand.u32 %v254, 4294901760
    %v256 = vsub.f32 %v254, %v255
    %v257 = vand.u32 %v256, 4294901760
    %258 = vmatpush1.msra.mxu0 %v257
    %259 = vmatprep.subr.mxu0 0.0
    %v260 = vand.u32 %v64, 4294901760
    %v261 = vsub.f32 %v64, %v260
    %v262 = vand.u32 %v261, 4294901760
    %v263 = vsub.f32 %v261, %v262
    %v264 = vand.u32 %v263, 4294901760
    %265 = vmatpush1.msra.mxu0 %v264
    %266 = vmatprep.subr.mxu0 0.0
    %v267 = vand.u32 %v65, 4294901760
    %v268 = vsub.f32 %v65, %v267
    %v269 = vand.u32 %v268, 4294901760
    %v270 = vsub.f32 %v268, %v269
    %v271 = vand.u32 %v270, 4294901760
    %272 = vmatpush1.msra.mxu0 %v271
    %273 = vmatprep.subr.mxu0 0.0
    %v274 = vand.u32 %v66, 4294901760
    %v275 = vsub.f32 %v66, %v274
    %v276 = vand.u32 %v275, 4294901760
    %v277 = vsub.f32 %v275, %v276
    %v278 = vand.u32 %v277, 4294901760
    %279 = vmatpush1.msra.mxu0 %v278
    %280 = vmatprep.subr.mxu0 0.0
    %v281 = vand.u32 %v67, 4294901760
    %v282 = vsub.f32 %v67, %v281
    %v283 = vand.u32 %v282, 4294901760
    %v284 = vsub.f32 %v282, %v283
    %v285 = vand.u32 %v284, 4294901760
    %286 = vmatpush1.msra.mxu0 %v285
    %287 = vmatprep.subr.mxu0 0.0
    %v288 = vand.u32 %v68, 4294901760
    %v289 = vsub.f32 %v68, %v288
    %v290 = vand.u32 %v289, 4294901760
    %v291 = vsub.f32 %v289, %v290
    %v292 = vand.u32 %v291, 4294901760
    %293 = vmatpush1.msra.mxu0 %v292
    %294 = vmatprep.subr.mxu0 0.0
    %v295 = vand.u32 %v69, 4294901760
    %v296 = vsub.f32 %v69, %v295
    %v297 = vand.u32 %v296, 4294901760
    %v298 = vsub.f32 %v296, %v297
    %v299 = vand.u32 %v298, 4294901760
    %300 = vmatpush1.msra.mxu0 %v299
    %301 = vmatprep.subr.mxu0 0.0
    %v302 = vand.u32 %v70, 4294901760
    %v303 = vsub.f32 %v70, %v302
    %v304 = vand.u32 %v303, 4294901760
    %v305 = vsub.f32 %v303, %v304
    %v306 = vand.u32 %v305, 4294901760
    %307 = vmatpush1.msra.mxu0 %v306
    %308 = vmatprep.subr.mxu0 0.0
    %v309 = vand.u32 %v71, 4294901760
    %v310 = vsub.f32 %v71, %v309
    %v311 = vand.u32 %v310, 4294901760
    %v312 = vsub.f32 %v310, %v311
    %v313 = vand.u32 %v312, 4294901760
    %314 = vmatpush1.msra.mxu0 %v313
    %315 = vmatprep.subr.mxu0 0.0
    %v316 = vand.u32 %v72, 4294901760
    %v317 = vsub.f32 %v72, %v316
    %v318 = vand.u32 %v317, 4294901760
    %v319 = vsub.f32 %v317, %v318
    %v320 = vand.u32 %v319, 4294901760
    %321 = vmatpush1.msra.mxu0 %v320
    %322 = vmatprep.subr.mxu0 0.0
    %v323 = vand.u32 %v73, 4294901760
    %v324 = vsub.f32 %v73, %v323
    %v325 = vand.u32 %v324, 4294901760
    %v326 = vsub.f32 %v324, %v325
    %v327 = vand.u32 %v326, 4294901760
    %328 = vmatpush1.msra.mxu0 %v327
    %329 = vmatprep.subr.mxu0 0.0
    %v330 = vand.u32 %v74, 4294901760
    %v331 = vsub.f32 %v74, %v330
    %v332 = vand.u32 %v331, 4294901760
    %v333 = vsub.f32 %v331, %v332
    %v334 = vand.u32 %v333, 4294901760
    %335 = vmatpush1.msra.mxu0 %v334
    %336 = vmatprep.subr.mxu0 0.0
    %v337 = vand.u32 %v75, 4294901760
    %v338 = vsub.f32 %v75, %v337
    %v339 = vand.u32 %v338, 4294901760
    %v340 = vsub.f32 %v338, %v339
    %v341 = vand.u32 %v340, 4294901760
    %342 = vmatpush1.msra.mxu0 %v341
    %343 = vmatprep.subr.mxu0 0.0
    %v344 = vand.u32 %v76, 4294901760
    %v345 = vsub.f32 %v76, %v344
    %v346 = vand.u32 %v345, 4294901760
    %v347 = vsub.f32 %v345, %v346
    %v348 = vand.u32 %v347, 4294901760
    %349 = vmatpush1.msra.mxu0 %v348
    %350 = vmatprep.subr.mxu0 0.0
    %v351 = vand.u32 %v77, 4294901760
    %v352 = vsub.f32 %v77, %v351
    %v353 = vand.u32 %v352, 4294901760
    %v354 = vsub.f32 %v352, %v353
    %v355 = vand.u32 %v354, 4294901760
    %356 = vmatpush1.msra.mxu0 %v355
    %357 = vmatprep.subr.mxu0 0.0
    %v358 = vand.u32 %v78, 4294901760
    %v359 = vsub.f32 %v78, %v358
    %v360 = vand.u32 %v359, 4294901760
    %v361 = vsub.f32 %v359, %v360
    %v362 = vand.u32 %v361, 4294901760
    %363 = vmatpush1.msra.mxu0 %v362
    %364 = vmatprep.subr.mxu0 0.0
    %v365 = vand.u32 %v79, 4294901760
    %v366 = vsub.f32 %v79, %v365
    %v367 = vand.u32 %v366, 4294901760
    %v368 = vsub.f32 %v366, %v367
    %v369 = vand.u32 %v368, 4294901760
    %370 = vmatpush1.msra.mxu0 %v369
    %371 = vmatprep.subr.mxu0 0.0
    %v372 = vand.u32 %v80, 4294901760
    %v373 = vsub.f32 %v80, %v372
    %v374 = vand.u32 %v373, 4294901760
    %v375 = vsub.f32 %v373, %v374
    %v376 = vand.u32 %v375, 4294901760
    %377 = vmatpush1.msra.mxu0 %v376
    %378 = vmatprep.subr.mxu0 0.0
    %v379 = vand.u32 %v81, 4294901760
    %v380 = vsub.f32 %v81, %v379
    %v381 = vand.u32 %v380, 4294901760
    %v382 = vsub.f32 %v380, %v381
    %v383 = vand.u32 %v382, 4294901760
    %384 = vmatpush1.msra.mxu0 %v383
    %385 = vmatprep.subr.mxu0 0.0
    %v386 = vand.u32 %v82, 4294901760
    %v387 = vsub.f32 %v82, %v386
    %v388 = vand.u32 %v387, 4294901760
    %v389 = vsub.f32 %v387, %v388
    %v390 = vand.u32 %v389, 4294901760
    %391 = vmatpush1.msra.mxu0 %v390
    %392 = vmatprep.subr.mxu0 0.0
    %v393 = vand.u32 %v83, 4294901760
    %v394 = vsub.f32 %v83, %v393
    %v395 = vand.u32 %v394, 4294901760
    %v396 = vsub.f32 %v394, %v395
    %v397 = vand.u32 %v396, 4294901760
    %398 = vmatpush1.msra.mxu0 %v397
    %399 = vmatprep.subr.mxu0 0.0
    %v400 = vand.u32 %v84, 4294901760
    %v401 = vsub.f32 %v84, %v400
    %v402 = vand.u32 %v401, 4294901760
    %v403 = vsub.f32 %v401, %v402
    %v404 = vand.u32 %v403, 4294901760
    %405 = vmatpush1.msra.mxu0 %v404
    %406 = vmatprep.subr.mxu0 0.0
    %v407 = vand.u32 %v85, 4294901760
    %v408 = vsub.f32 %v85, %v407
    %v409 = vand.u32 %v408, 4294901760
    %v410 = vsub.f32 %v408, %v409
    %v411 = vand.u32 %v410, 4294901760
    %412 = vmatpush1.msra.mxu0 %v411
    %413 = vmatprep.subr.mxu0 0.0
    %v414 = vand.u32 %v86, 4294901760
    %v415 = vsub.f32 %v86, %v414
    %v416 = vand.u32 %v415, 4294901760
    %v417 = vsub.f32 %v415, %v416
    %v418 = vand.u32 %v417, 4294901760
    %419 = vmatpush1.msra.mxu0 %v418
    %420 = vmatprep.subr.mxu0 0.0
    %v421 = vand.u32 %v87, 4294901760
    %v422 = vsub.f32 %v87, %v421
    %v423 = vand.u32 %v422, 4294901760
    %v424 = vsub.f32 %v422, %v423
    %v425 = vand.u32 %v424, 4294901760
    %426 = vmatpush1.msra.mxu0 %v425
    %v427 = vand.u32 %v89, 4294901760
    %428 = vmatprep.mubr.f32.mxu0 %v427
    %v429 = vand.u32 %v55, 4294901760
    %430 = vmatmul.mubr.f32.gmra.mrb[0].mxu0 %v429
    %v431 = vpop.f32.mrb[0].mxu0
    %v432 = vadd.f32 %v200, %v431
    %v433 = vpop.f32.mrb[0].mxu0
    %434 = vdwg.mxu0
    %435 = vmatprep.subr.mxu0 0.0
    %v436 = vand.u32 %v56, 4294901760
    %v437 = vsub.f32 %v56, %v436
    %438 = vmatpush1.msra.mxu0 %v437
    %439 = vmatprep.subr.mxu0 0.0
    %v440 = vand.u32 %v57, 4294901760
    %v441 = vsub.f32 %v57, %v440
    %442 = vmatpush1.msra.mxu0 %v441
    %443 = vmatprep.subr.mxu0 0.0
    %v444 = vand.u32 %v58, 4294901760
    %v445 = vsub.f32 %v58, %v444
    %446 = vmatpush1.msra.mxu0 %v445
    %447 = vmatprep.subr.mxu0 0.0
    %v448 = vand.u32 %v59, 4294901760
    %v449 = vsub.f32 %v59, %v448
    %450 = vmatpush1.msra.mxu0 %v449
    %451 = vmatprep.subr.mxu0 0.0
    %v452 = vand.u32 %v60, 4294901760
    %v453 = vsub.f32 %v60, %v452
    %454 = vmatpush1.msra.mxu0 %v453
    %455 = vmatprep.subr.mxu0 0.0
    %v456 = vand.u32 %v61, 4294901760
    %v457 = vsub.f32 %v61, %v456
    %458 = vmatpush1.msra.mxu0 %v457
    %459 = vmatprep.subr.mxu0 0.0
    %v460 = vand.u32 %v62, 4294901760
    %v461 = vsub.f32 %v62, %v460
    %462 = vmatpush1.msra.mxu0 %v461
    %463 = vmatprep.subr.mxu0 0.0
    %v464 = vand.u32 %v63, 4294901760
    %v465 = vsub.f32 %v63, %v464
    %466 = vmatpush1.msra.mxu0 %v465
    %467 = vmatprep.subr.mxu0 0.0
    %v468 = vand.u32 %v64, 4294901760
    %v469 = vsub.f32 %v64, %v468
    %470 = vmatpush1.msra.mxu0 %v469
    %471 = vmatprep.subr.mxu0 0.0
    %v472 = vand.u32 %v65, 4294901760
    %v473 = vsub.f32 %v65, %v472
    %474 = vmatpush1.msra.mxu0 %v473
    %475 = vmatprep.subr.mxu0 0.0
    %v476 = vand.u32 %v66, 4294901760
    %v477 = vsub.f32 %v66, %v476
    %478 = vmatpush1.msra.mxu0 %v477
    %479 = vmatprep.subr.mxu0 0.0
    %v480 = vand.u32 %v67, 4294901760
    %v481 = vsub.f32 %v67, %v480
    %482 = vmatpush1.msra.mxu0 %v481
    %483 = vmatprep.subr.mxu0 0.0
    %v484 = vand.u32 %v68, 4294901760
    %v485 = vsub.f32 %v68, %v484
    %486 = vmatpush1.msra.mxu0 %v485
    %487 = vmatprep.subr.mxu0 0.0
    %v488 = vand.u32 %v69, 4294901760
    %v489 = vsub.f32 %v69, %v488
    %490 = vmatpush1.msra.mxu0 %v489
    %491 = vmatprep.subr.mxu0 0.0
    %v492 = vand.u32 %v70, 4294901760
    %v493 = vsub.f32 %v70, %v492
    %494 = vmatpush1.msra.mxu0 %v493
    %495 = vmatprep.subr.mxu0 0.0
    %v496 = vand.u32 %v71, 4294901760
    %v497 = vsub.f32 %v71, %v496
    %498 = vmatpush1.msra.mxu0 %v497
    %499 = vmatprep.subr.mxu0 0.0
    %v500 = vand.u32 %v72, 4294901760
    %v501 = vsub.f32 %v72, %v500
    %502 = vmatpush1.msra.mxu0 %v501
    %503 = vmatprep.subr.mxu0 0.0
    %v504 = vand.u32 %v73, 4294901760
    %v505 = vsub.f32 %v73, %v504
    %506 = vmatpush1.msra.mxu0 %v505
    %507 = vmatprep.subr.mxu0 0.0
    %v508 = vand.u32 %v74, 4294901760
    %v509 = vsub.f32 %v74, %v508
    %510 = vmatpush1.msra.mxu0 %v509
    %511 = vmatprep.subr.mxu0 0.0
    %v512 = vand.u32 %v75, 4294901760
    %v513 = vsub.f32 %v75, %v512
    %514 = vmatpush1.msra.mxu0 %v513
    %515 = vmatprep.subr.mxu0 0.0
    %v516 = vand.u32 %v76, 4294901760
    %v517 = vsub.f32 %v76, %v516
    %518 = vmatpush1.msra.mxu0 %v517
    %519 = vmatprep.subr.mxu0 0.0
    %v520 = vand.u32 %v77, 4294901760
    %v521 = vsub.f32 %v77, %v520
    %522 = vmatpush1.msra.mxu0 %v521
    %523 = vmatprep.subr.mxu0 0.0
    %v524 = vand.u32 %v78, 4294901760
    %v525 = vsub.f32 %v78, %v524
    %526 = vmatpush1.msra.mxu0 %v525
    %527 = vmatprep.subr.mxu0 0.0
    %v528 = vand.u32 %v79, 4294901760
    %v529 = vsub.f32 %v79, %v528
    %530 = vmatpush1.msra.mxu0 %v529
    %531 = vmatprep.subr.mxu0 0.0
    %v532 = vand.u32 %v80, 4294901760
    %v533 = vsub.f32 %v80, %v532
    %534 = vmatpush1.msra.mxu0 %v533
    %535 = vmatprep.subr.mxu0 0.0
    %v536 = vand.u32 %v81, 4294901760
    %v537 = vsub.f32 %v81, %v536
    %538 = vmatpush1.msra.mxu0 %v537
    %539 = vmatprep.subr.mxu0 0.0
    %v540 = vand.u32 %v82, 4294901760
    %v541 = vsub.f32 %v82, %v540
    %542 = vmatpush1.msra.mxu0 %v541
    %543 = vmatprep.subr.mxu0 0.0
    %v544 = vand.u32 %v83, 4294901760
    %v545 = vsub.f32 %v83, %v544
    %546 = vmatpush1.msra.mxu0 %v545
    %547 = vmatprep.subr.mxu0 0.0
    %v548 = vand.u32 %v84, 4294901760
    %v549 = vsub.f32 %v84, %v548
    %550 = vmatpush1.msra.mxu0 %v549
    %551 = vmatprep.subr.mxu0 0.0
    %v552 = vand.u32 %v85, 4294901760
    %v553 = vsub.f32 %v85, %v552
    %554 = vmatpush1.msra.mxu0 %v553
    %555 = vmatprep.subr.mxu0 0.0
    %v556 = vand.u32 %v86, 4294901760
    %v557 = vsub.f32 %v86, %v556
    %558 = vmatpush1.msra.mxu0 %v557
    %559 = vmatprep.subr.mxu0 0.0
    %v560 = vand.u32 %v87, 4294901760
    %v561 = vsub.f32 %v87, %v560
    %562 = vmatpush1.msra.mxu0 %v561
    %v563 = vand.u32 %v89, 4294901760
    %v564 = vsub.f32 %v89, %v563
    %565 = vmatprep.mubr.f32.mxu0 %v564
    %v566 = vand.u32 %v55, 4294901760
    %v567 = vsub.f32 %v55, %v566
    %568 = vmatmul.mubr.f32.gmra.mrb[0].mxu0 %v567
    %v569 = vpop.f32.mrb[0].mxu0
    %v570 = vadd.f32 %v432, %v569
    %v571 = vpop.f32.mrb[0].mxu0
    %572 = vdwg.mxu0
    %573 = vmatprep.subr.mxu0 0.0
    %v574 = vand.u32 %v56, 4294901760
    %575 = vmatpush1.msra.mxu0 %v574
    %576 = vmatprep.subr.mxu0 0.0
    %v577 = vand.u32 %v57, 4294901760
    %578 = vmatpush1.msra.mxu0 %v577
    %579 = vmatprep.subr.mxu0 0.0
    %v580 = vand.u32 %v58, 4294901760
    %581 = vmatpush1.msra.mxu0 %v580
    %582 = vmatprep.subr.mxu0 0.0
    %v583 = vand.u32 %v59, 4294901760
    %584 = vmatpush1.msra.mxu0 %v583
    %585 = vmatprep.subr.mxu0 0.0
    %v586 = vand.u32 %v60, 4294901760
    %587 = vmatpush1.msra.mxu0 %v586
    %588 = vmatprep.subr.mxu0 0.0
    %v589 = vand.u32 %v61, 4294901760
    %590 = vmatpush1.msra.mxu0 %v589
    %591 = vmatprep.subr.mxu0 0.0
    %v592 = vand.u32 %v62, 4294901760
    %593 = vmatpush1.msra.mxu0 %v592
    %594 = vmatprep.subr.mxu0 0.0
    %v595 = vand.u32 %v63, 4294901760
    %596 = vmatpush1.msra.mxu0 %v595
    %597 = vmatprep.subr.mxu0 0.0
    %v598 = vand.u32 %v64, 4294901760
    %599 = vmatpush1.msra.mxu0 %v598
    %600 = vmatprep.subr.mxu0 0.0
    %v601 = vand.u32 %v65, 4294901760
    %602 = vmatpush1.msra.mxu0 %v601
    %603 = vmatprep.subr.mxu0 0.0
    %v604 = vand.u32 %v66, 4294901760
    %605 = vmatpush1.msra.mxu0 %v604
    %606 = vmatprep.subr.mxu0 0.0
    %v607 = vand.u32 %v67, 4294901760
    %608 = vmatpush1.msra.mxu0 %v607
    %609 = vmatprep.subr.mxu0 0.0
    %v610 = vand.u32 %v68, 4294901760
    %611 = vmatpush1.msra.mxu0 %v610
    %612 = vmatprep.subr.mxu0 0.0
    %v613 = vand.u32 %v69, 4294901760
    %614 = vmatpush1.msra.mxu0 %v613
    %615 = vmatprep.subr.mxu0 0.0
    %v616 = vand.u32 %v70, 4294901760
    %617 = vmatpush1.msra.mxu0 %v616
    %618 = vmatprep.subr.mxu0 0.0
    %v619 = vand.u32 %v71, 4294901760
    %620 = vmatpush1.msra.mxu0 %v619
    %621 = vmatprep.subr.mxu0 0.0
    %v622 = vand.u32 %v72, 4294901760
    %623 = vmatpush1.msra.mxu0 %v622
    %624 = vmatprep.subr.mxu0 0.0
    %v625 = vand.u32 %v73, 4294901760
    %626 = vmatpush1.msra.mxu0 %v625
    %627 = vmatprep.subr.mxu0 0.0
    %v628 = vand.u32 %v74, 4294901760
    %629 = vmatpush1.msra.mxu0 %v628
    %630 = vmatprep.subr.mxu0 0.0
    %v631 = vand.u32 %v75, 4294901760
    %632 = vmatpush1.msra.mxu0 %v631
    %633 = vmatprep.subr.mxu0 0.0
    %v634 = vand.u32 %v76, 4294901760
    %635 = vmatpush1.msra.mxu0 %v634
    %636 = vmatprep.subr.mxu0 0.0
    %v637 = vand.u32 %v77, 4294901760
    %638 = vmatpush1.msra.mxu0 %v637
    %639 = vmatprep.subr.mxu0 0.0
    %v640 = vand.u32 %v78, 4294901760
    %641 = vmatpush1.msra.mxu0 %v640
    %642 = vmatprep.subr.mxu0 0.0
    %v643 = vand.u32 %v79, 4294901760
    %644 = vmatpush1.msra.mxu0 %v643
    %645 = vmatprep.subr.mxu0 0.0
    %v646 = vand.u32 %v80, 4294901760
    %647 = vmatpush1.msra.mxu0 %v646
    %648 = vmatprep.subr.mxu0 0.0
    %v649 = vand.u32 %v81, 4294901760
    %650 = vmatpush1.msra.mxu0 %v649
    %651 = vmatprep.subr.mxu0 0.0
    %v652 = vand.u32 %v82, 4294901760
    %653 = vmatpush1.msra.mxu0 %v652
    %654 = vmatprep.subr.mxu0 0.0
    %v655 = vand.u32 %v83, 4294901760
    %656 = vmatpush1.msra.mxu0 %v655
    %657 = vmatprep.subr.mxu0 0.0
    %v658 = vand.u32 %v84, 4294901760
    %659 = vmatpush1.msra.mxu0 %v658
    %660 = vmatprep.subr.mxu0 0.0
    %v661 = vand.u32 %v85, 4294901760
    %662 = vmatpush1.msra.mxu0 %v661
    %663 = vmatprep.subr.mxu0 0.0
    %v664 = vand.u32 %v86, 4294901760
    %665 = vmatpush1.msra.mxu0 %v664
    %666 = vmatprep.subr.mxu0 0.0
    %v667 = vand.u32 %v87, 4294901760
    %668 = vmatpush1.msra.mxu0 %v667
    %v669 = vand.u32 %v89, 4294901760
    %v670 = vsub.f32 %v89, %v669
    %v671 = vand.u32 %v670, 4294901760
    %672 = vmatprep.mubr.f32.mxu0 %v671
    %v673 = vand.u32 %v55, 4294901760
    %v674 = vsub.f32 %v55, %v673
    %v675 = vand.u32 %v674, 4294901760
    %676 = vmatmul.mubr.f32.gmra.mrb[0].mxu0 %v675
    %v677 = vpop.f32.mrb[0].mxu0
    %v678 = vadd.f32 %v570, %v677
    %v679 = vpop.f32.mrb[0].mxu0
    %680 = vdwg.mxu0
    %681 = vmatprep.subr.mxu0 0.0
    %v682 = vand.u32 %v56, 4294901760
    %v683 = vsub.f32 %v56, %v682
    %v684 = vand.u32 %v683, 4294901760
    %685 = vmatpush1.msra.mxu0 %v684
    %686 = vmatprep.subr.mxu0 0.0
    %v687 = vand.u32 %v57, 4294901760
    %v688 = vsub.f32 %v57, %v687
    %v689 = vand.u32 %v688, 4294901760
    %690 = vmatpush1.msra.mxu0 %v689
    %691 = vmatprep.subr.mxu0 0.0
    %v692 = vand.u32 %v58, 4294901760
    %v693 = vsub.f32 %v58, %v692
    %v694 = vand.u32 %v693, 4294901760
    %695 = vmatpush1.msra.mxu0 %v694
    %696 = vmatprep.subr.mxu0 0.0
    %v697 = vand.u32 %v59, 4294901760
    %v698 = vsub.f32 %v59, %v697
    %v699 = vand.u32 %v698, 4294901760
    %700 = vmatpush1.msra.mxu0 %v699
    %701 = vmatprep.subr.mxu0 0.0
    %v702 = vand.u32 %v60, 4294901760
    %v703 = vsub.f32 %v60, %v702
    %v704 = vand.u32 %v703, 4294901760
    %705 = vmatpush1.msra.mxu0 %v704
    %706 = vmatprep.subr.mxu0 0.0
    %v707 = vand.u32 %v61, 4294901760
    %v708 = vsub.f32 %v61, %v707
    %v709 = vand.u32 %v708, 4294901760
    %710 = vmatpush1.msra.mxu0 %v709
    %711 = vmatprep.subr.mxu0 0.0
    %v712 = vand.u32 %v62, 4294901760
    %v713 = vsub.f32 %v62, %v712
    %v714 = vand.u32 %v713, 4294901760
    %715 = vmatpush1.msra.mxu0 %v714
    %716 = vmatprep.subr.mxu0 0.0
    %v717 = vand.u32 %v63, 4294901760
    %v718 = vsub.f32 %v63, %v717
    %v719 = vand.u32 %v718, 4294901760
    %720 = vmatpush1.msra.mxu0 %v719
    %721 = vmatprep.subr.mxu0 0.0
    %v722 = vand.u32 %v64, 4294901760
    %v723 = vsub.f32 %v64, %v722
    %v724 = vand.u32 %v723, 4294901760
    %725 = vmatpush1.msra.mxu0 %v724
    %726 = vmatprep.subr.mxu0 0.0
    %v727 = vand.u32 %v65, 4294901760
    %v728 = vsub.f32 %v65, %v727
    %v729 = vand.u32 %v728, 4294901760
    %730 = vmatpush1.msra.mxu0 %v729
    %731 = vmatprep.subr.mxu0 0.0
    %v732 = vand.u32 %v66, 4294901760
    %v733 = vsub.f32 %v66, %v732
    %v734 = vand.u32 %v733, 4294901760
    %735 = vmatpush1.msra.mxu0 %v734
    %736 = vmatprep.subr.mxu0 0.0
    %v737 = vand.u32 %v67, 4294901760
    %v738 = vsub.f32 %v67, %v737
    %v739 = vand.u32 %v738, 4294901760
    %740 = vmatpush1.msra.mxu0 %v739
    %741 = vmatprep.subr.mxu0 0.0
    %v742 = vand.u32 %v68, 4294901760
    %v743 = vsub.f32 %v68, %v742
    %v744 = vand.u32 %v743, 4294901760
    %745 = vmatpush1.msra.mxu0 %v744
    %746 = vmatprep.subr.mxu0 0.0
    %v747 = vand.u32 %v69, 4294901760
    %v748 = vsub.f32 %v69, %v747
    %v749 = vand.u32 %v748, 4294901760
    %750 = vmatpush1.msra.mxu0 %v749
    %751 = vmatprep.subr.mxu0 0.0
    %v752 = vand.u32 %v70, 4294901760
    %v753 = vsub.f32 %v70, %v752
    %v754 = vand.u32 %v753, 4294901760
    %755 = vmatpush1.msra.mxu0 %v754
    %756 = vmatprep.subr.mxu0 0.0
    %v757 = vand.u32 %v71, 4294901760
    %v758 = vsub.f32 %v71, %v757
    %v759 = vand.u32 %v758, 4294901760
    %760 = vmatpush1.msra.mxu0 %v759
    %761 = vmatprep.subr.mxu0 0.0
    %v762 = vand.u32 %v72, 4294901760
    %v763 = vsub.f32 %v72, %v762
    %v764 = vand.u32 %v763, 4294901760
    %765 = vmatpush1.msra.mxu0 %v764
    %766 = vmatprep.subr.mxu0 0.0
    %v767 = vand.u32 %v73, 4294901760
    %v768 = vsub.f32 %v73, %v767
    %v769 = vand.u32 %v768, 4294901760
    %770 = vmatpush1.msra.mxu0 %v769
    %771 = vmatprep.subr.mxu0 0.0
    %v772 = vand.u32 %v74, 4294901760
    %v773 = vsub.f32 %v74, %v772
    %v774 = vand.u32 %v773, 4294901760
    %775 = vmatpush1.msra.mxu0 %v774
    %776 = vmatprep.subr.mxu0 0.0
    %v777 = vand.u32 %v75, 4294901760
    %v778 = vsub.f32 %v75, %v777
    %v779 = vand.u32 %v778, 4294901760
    %780 = vmatpush1.msra.mxu0 %v779
    %781 = vmatprep.subr.mxu0 0.0
    %v782 = vand.u32 %v76, 4294901760
    %v783 = vsub.f32 %v76, %v782
    %v784 = vand.u32 %v783, 4294901760
    %785 = vmatpush1.msra.mxu0 %v784
    %786 = vmatprep.subr.mxu0 0.0
    %v787 = vand.u32 %v77, 4294901760
    %v788 = vsub.f32 %v77, %v787
    %v789 = vand.u32 %v788, 4294901760
    %790 = vmatpush1.msra.mxu0 %v789
    %791 = vmatprep.subr.mxu0 0.0
    %v792 = vand.u32 %v78, 4294901760
    %v793 = vsub.f32 %v78, %v792
    %v794 = vand.u32 %v793, 4294901760
    %795 = vmatpush1.msra.mxu0 %v794
    %796 = vmatprep.subr.mxu0 0.0
    %v797 = vand.u32 %v79, 4294901760
    %v798 = vsub.f32 %v79, %v797
    %v799 = vand.u32 %v798, 4294901760
    %800 = vmatpush1.msra.mxu0 %v799
    %801 = vmatprep.subr.mxu0 0.0
    %v802 = vand.u32 %v80, 4294901760
    %v803 = vsub.f32 %v80, %v802
    %v804 = vand.u32 %v803, 4294901760
    %805 = vmatpush1.msra.mxu0 %v804
    %806 = vmatprep.subr.mxu0 0.0
    %v807 = vand.u32 %v81, 4294901760
    %v808 = vsub.f32 %v81, %v807
    %v809 = vand.u32 %v808, 4294901760
    %810 = vmatpush1.msra.mxu0 %v809
    %811 = vmatprep.subr.mxu0 0.0
    %v812 = vand.u32 %v82, 4294901760
    %v813 = vsub.f32 %v82, %v812
    %v814 = vand.u32 %v813, 4294901760
    %815 = vmatpush1.msra.mxu0 %v814
    %816 = vmatprep.subr.mxu0 0.0
    %v817 = vand.u32 %v83, 4294901760
    %v818 = vsub.f32 %v83, %v817
    %v819 = vand.u32 %v818, 4294901760
    %820 = vmatpush1.msra.mxu0 %v819
    %821 = vmatprep.subr.mxu0 0.0
    %v822 = vand.u32 %v84, 4294901760
    %v823 = vsub.f32 %v84, %v822
    %v824 = vand.u32 %v823, 4294901760
    %825 = vmatpush1.msra.mxu0 %v824
    %826 = vmatprep.subr.mxu0 0.0
    %v827 = vand.u32 %v85, 4294901760
    %v828 = vsub.f32 %v85, %v827
    %v829 = vand.u32 %v828, 4294901760
    %830 = vmatpush1.msra.mxu0 %v829
    %831 = vmatprep.subr.mxu0 0.0
    %v832 = vand.u32 %v86, 4294901760
    %v833 = vsub.f32 %v86, %v832
    %v834 = vand.u32 %v833, 4294901760
    %835 = vmatpush1.msra.mxu0 %v834
    %836 = vmatprep.subr.mxu0 0.0
    %v837 = vand.u32 %v87, 4294901760
    %v838 = vsub.f32 %v87, %v837
    %v839 = vand.u32 %v838, 4294901760
    %840 = vmatpush1.msra.mxu0 %v839
    %v841 = vand.u32 %v89, 4294901760
    %842 = vmatprep.mubr.f32.mxu0 %v841
    %v843 = vand.u32 %v55, 4294901760
    %844 = vmatmul.mubr.f32.gmra.mrb[0].mxu0 %v843
    %v845 = vpop.f32.mrb[0].mxu0
    %v846 = vadd.f32 %v678, %v845
    %v847 = vpop.f32.mrb[0].mxu0
    %848 = vdwg.mxu0
    %849 = vmatprep.subr.mxu0 0.0
    %v850 = vand.u32 %v56, 4294901760
    %851 = vmatpush1.msra.mxu0 %v850
    %852 = vmatprep.subr.mxu0 0.0
    %v853 = vand.u32 %v57, 4294901760
    %854 = vmatpush1.msra.mxu0 %v853
    %855 = vmatprep.subr.mxu0 0.0
    %v856 = vand.u32 %v58, 4294901760
    %857 = vmatpush1.msra.mxu0 %v856
    %858 = vmatprep.subr.mxu0 0.0
    %v859 = vand.u32 %v59, 4294901760
    %860 = vmatpush1.msra.mxu0 %v859
    %861 = vmatprep.subr.mxu0 0.0
    %v862 = vand.u32 %v60, 4294901760
    %863 = vmatpush1.msra.mxu0 %v862
    %864 = vmatprep.subr.mxu0 0.0
    %v865 = vand.u32 %v61, 4294901760
    %866 = vmatpush1.msra.mxu0 %v865
    %867 = vmatprep.subr.mxu0 0.0
    %v868 = vand.u32 %v62, 4294901760
    %869 = vmatpush1.msra.mxu0 %v868
    %870 = vmatprep.subr.mxu0 0.0
    %v871 = vand.u32 %v63, 4294901760
    %872 = vmatpush1.msra.mxu0 %v871
    %873 = vmatprep.subr.mxu0 0.0
    %v874 = vand.u32 %v64, 4294901760
    %875 = vmatpush1.msra.mxu0 %v874
    %876 = vmatprep.subr.mxu0 0.0
    %v877 = vand.u32 %v65, 4294901760
    %878 = vmatpush1.msra.mxu0 %v877
    %879 = vmatprep.subr.mxu0 0.0
    %v880 = vand.u32 %v66, 4294901760
    %881 = vmatpush1.msra.mxu0 %v880
    %882 = vmatprep.subr.mxu0 0.0
    %v883 = vand.u32 %v67, 4294901760
    %884 = vmatpush1.msra.mxu0 %v883
    %885 = vmatprep.subr.mxu0 0.0
    %v886 = vand.u32 %v68, 4294901760
    %887 = vmatpush1.msra.mxu0 %v886
    %888 = vmatprep.subr.mxu0 0.0
    %v889 = vand.u32 %v69, 4294901760
    %890 = vmatpush1.msra.mxu0 %v889
    %891 = vmatprep.subr.mxu0 0.0
    %v892 = vand.u32 %v70, 4294901760
    %893 = vmatpush1.msra.mxu0 %v892
    %894 = vmatprep.subr.mxu0 0.0
    %v895 = vand.u32 %v71, 4294901760
    %896 = vmatpush1.msra.mxu0 %v895
    %897 = vmatprep.subr.mxu0 0.0
    %v898 = vand.u32 %v72, 4294901760
    %899 = vmatpush1.msra.mxu0 %v898
    %900 = vmatprep.subr.mxu0 0.0
    %v901 = vand.u32 %v73, 4294901760
    %902 = vmatpush1.msra.mxu0 %v901
    %903 = vmatprep.subr.mxu0 0.0
    %v904 = vand.u32 %v74, 4294901760
    %905 = vmatpush1.msra.mxu0 %v904
    %906 = vmatprep.subr.mxu0 0.0
    %v907 = vand.u32 %v75, 4294901760
    %908 = vmatpush1.msra.mxu0 %v907
    %909 = vmatprep.subr.mxu0 0.0
    %v910 = vand.u32 %v76, 4294901760
    %911 = vmatpush1.msra.mxu0 %v910
    %912 = vmatprep.subr.mxu0 0.0
    %v913 = vand.u32 %v77, 4294901760
    %914 = vmatpush1.msra.mxu0 %v913
    %915 = vmatprep.subr.mxu0 0.0
    %v916 = vand.u32 %v78, 4294901760
    %917 = vmatpush1.msra.mxu0 %v916
    %918 = vmatprep.subr.mxu0 0.0
    %v919 = vand.u32 %v79, 4294901760
    %920 = vmatpush1.msra.mxu0 %v919
    %921 = vmatprep.subr.mxu0 0.0
    %v922 = vand.u32 %v80, 4294901760
    %923 = vmatpush1.msra.mxu0 %v922
    %924 = vmatprep.subr.mxu0 0.0
    %v925 = vand.u32 %v81, 4294901760
    %926 = vmatpush1.msra.mxu0 %v925
    %927 = vmatprep.subr.mxu0 0.0
    %v928 = vand.u32 %v82, 4294901760
    %929 = vmatpush1.msra.mxu0 %v928
    %930 = vmatprep.subr.mxu0 0.0
    %v931 = vand.u32 %v83, 4294901760
    %932 = vmatpush1.msra.mxu0 %v931
    %933 = vmatprep.subr.mxu0 0.0
    %v934 = vand.u32 %v84, 4294901760
    %935 = vmatpush1.msra.mxu0 %v934
    %936 = vmatprep.subr.mxu0 0.0
    %v937 = vand.u32 %v85, 4294901760
    %938 = vmatpush1.msra.mxu0 %v937
    %939 = vmatprep.subr.mxu0 0.0
    %v940 = vand.u32 %v86, 4294901760
    %941 = vmatpush1.msra.mxu0 %v940
    %942 = vmatprep.subr.mxu0 0.0
    %v943 = vand.u32 %v87, 4294901760
    %944 = vmatpush1.msra.mxu0 %v943
    %v945 = vand.u32 %v89, 4294901760
    %946 = vmatprep.mubr.f32.mxu0 %v945
    %v947 = vand.u32 %v55, 4294901760
    %948 = vmatmul.mubr.f32.gmra.mrb[0].mxu0 %v947
    %v949 = vpop.f32.mrb[0].mxu0
    %v950 = vadd.f32 %v846, %v949
    %v951 = vpop.f32.mrb[0].mxu0
    %952 = vdwg.mxu0
    %v953 = vmax.f32 %v950, 0.0
    %v954 = vrsqrt.pop %v953
    %v955 = vmul.f32 %v953, %v954
    %vm956 = vcmp.eq.f32.partialorder %v953, inf
    %v957 = vsel %vm956, %v953, %v955
    %vm958 = vcmp.eq.f32.partialorder %v953, 0.0
    %v959 = vand.u32 %v953, 2147483648
    %v960 = vsel %vm958, %v959, %v957
    %961 = vst [vmem:[#allocation8] sm:$0xf] %v960
    // Predicated region
    $region26: #{tpu_custom_call.1} parent=1 // pred_check
      _
    $region27: #{tpu_custom_call.1} parent=1 // pred_check_branch
      %963 = sbr.rel (0) target = $region29
    $region28: #{tpu_custom_call.1} parent=1 // pred_region
      %s965 = ssub.s32 64, 64
      %966 = vsyncadd [#allocation4], %s965
      %s968 = sshll.u32 [#allocation8], 4
      %s969 = int_to_ptr.vmem [resolvable:$true] %s968
      %971 = dma.vmem_to_hbm [thread:$0]  %s969, 64, %s3, [#allocation4]
    $region29: #{tpu_custom_call.1} parent=1 // pred_fallthru
      _
    // Predicated region
    $region30: #{tpu_custom_call.1} parent=1 // pred_check
      _
    $region31: #{tpu_custom_call.1} parent=1 // pred_check_branch
      %973 = sbr.rel (0) target = $region33
    $region32: #{tpu_custom_call.1} parent=1 // pred_region
      %974 = dma.done [#allocation4], 64
    $region33: #{tpu_custom_call.1} parent=1 // pred_fallthru
      _
    %975 = vsyncpa [#allocation3], 1
    %976 = vsyncpa [#allocation6], 1
    %977 = vsyncpa [#allocation4], 1

</llo_original>
